<compile_context>
chip_gen: v7x
topology: tpu7x:2x2x1
jax: 0.10.0
libtpu: 0.0.40
codegen_flags: <defaults>
</compile_context>

<pallas_src>
import functools
import math

import jax
import jax.numpy as jnp
from jax.experimental import pallas as pl
from jax.experimental.pallas import tpu as pltpu


def _vmem_limit_bytes():
    """Generation-aware scoped-VMEM budget (~75% of physical per-core VMEM)."""
    cap = 64 * 1024 * 1024  # conservative fallback (v7x physical per-TC VMEM)
    try:
        info = pltpu.get_tpu_info()
        cap = int(getattr(info, "vmem_capacity_bytes", cap)) or cap
    except Exception:
        pass
    return (cap * 3) // 4


def _pick_tile(dim, candidates):
    """Largest candidate evenly dividing `dim`, else the full dim (grid of 1)."""
    for c in candidates:
        if c <= dim and dim % c == 0:
            return c
    return dim


def _halve(t, dim, floor):
    """Halve tile t if the result still divides dim and stays >= floor."""
    if t > floor and t % 2 == 0 and dim % (t // 2) == 0:
        return t // 2
    return t


# ---------------------------------------------------------------------------
# Tiled projection with K-reduction: out = x @ w_t + b
#   x: (M, K), w_t: (K, N), b: (1, N); grid = (M//tm, N//tn, K//tk)
# ---------------------------------------------------------------------------
def _matmul_bias_kernel(x_ref, w_ref, b_ref, o_ref, acc_ref, *, mxu_bf16):
    kk = pl.program_id(2)

    @pl.when(kk == 0)
    def _():
        acc_ref[...] = jnp.zeros_like(acc_ref)

    x = x_ref[...]
    w = w_ref[...]
    if mxu_bf16 and x.dtype == jnp.float32:
        x = x.astype(jnp.bfloat16)
        w = w.astype(jnp.bfloat16)
    acc_ref[...] += jnp.dot(x, w, preferred_element_type=jnp.float32)

    @pl.when(kk == pl.num_programs(2) - 1)
    def _():
        # Bias added once, in the final cast/store path only.
        o_ref[...] = (acc_ref[...] + b_ref[...].astype(jnp.float32)
                      ).astype(o_ref.dtype)


def _projection(x2d, w_t, b_row, out_dtype, *, vmem_limit, mxu_bf16):
    M, K = x2d.shape
    N = w_t.shape[1]
    in_bytes = x2d.dtype.itemsize
    w_bytes = w_t.dtype.itemsize
    out_bytes = jnp.dtype(out_dtype).itemsize

    tm = _pick_tile(M, (1024, 512, 256, 128, 64, 32, 16, 8))
    tn = _pick_tile(N, (2048, 1024, 512, 256, 128))  # lane-dense output tiles
    tk = _pick_tile(K, (2048, 1024, 512, 256, 128))

    budget = int(vmem_limit * 0.8)

    def cost(tm_, tn_, tk_):
        # double-buffered x, w, bias, out tiles + f32 accumulator scratch
        return (2 * (tm_ * tk_ * in_bytes + tk_ * tn_ * w_bytes
                     + tn_ * w_bytes + tm_ * tn_ * out_bytes)
                + tm_ * tn_ * 4)

    # Weight HBM traffic scales as (M/tm)*K*N: preserve tm, shrink tn first,
    # then the K chunk, then tm — only under VMEM pressure.
    for _ in range(64):
        if cost(tm, tn, tk) <= budget:
            break
        new_tn = _halve(tn, N, 128)
        if new_tn != tn:
            tn = new_tn
            continue
        new_tk = _halve(tk, K, 128)
        if new_tk != tk:
            tk = new_tk
            continue
        new_tm = _halve(tm, M, 8)
        if new_tm == tm:
            break
        tm = new_tm

    kernel = functools.partial(_matmul_bias_kernel, mxu_bf16=mxu_bf16)
    return pl.pallas_call(
        kernel,
        out_shape=jax.ShapeDtypeStruct((M, N), out_dtype),
        grid_spec=pltpu.PrefetchScalarGridSpec(
            num_scalar_prefetch=0,
            grid=(M // tm, N // tn, K // tk),
            in_specs=[
                pl.BlockSpec((tm, tk), lambda i, j, kk: (i, kk)),
                pl.BlockSpec((tk, tn), lambda i, j, kk: (kk, j)),
                pl.BlockSpec((1, tn), lambda i, j, kk: (0, j)),
            ],
            out_specs=pl.BlockSpec((tm, tn), lambda i, j, kk: (i, j)),
            scratch_shapes=[pltpu.VMEM((tm, tn), jnp.float32)],
        ),
        compiler_params=pltpu.CompilerParams(
            dimension_semantics=("parallel", "parallel", "arbitrary"),
            vmem_limit_bytes=vmem_limit,
        ),
    )(x2d, w_t, b_row)


# ---------------------------------------------------------------------------
# Flash attention directly on (B, L, E) layout.
#   grid = (B * head_groups, Lq tiles, Lk tiles); each step handles G heads.
# ---------------------------------------------------------------------------
def _flash_attn_kernel(q_ref, k_ref, v_ref, o_ref, m_sc, l_sc, acc_sc, *,
                       G, Dh, mxu_bf16):
    kv = pl.program_id(2)

    @pl.when(kv == 0)
    def _():
        m_sc[...] = jnp.full_like(m_sc, -jnp.inf)
        l_sc[...] = jnp.zeros_like(l_sc)
        acc_sc[...] = jnp.zeros_like(acc_sc)

    q_all = q_ref[0]      # (tq, G*Dh), native dtype, lane-dense block
    k_all = k_ref[0]      # (tk, G*Dh)
    v_all = v_ref[0]      # (tk, G*Dh)
    if mxu_bf16 and q_all.dtype == jnp.float32:
        q_all = q_all.astype(jnp.bfloat16)
        k_all = k_all.astype(jnp.bfloat16)
        v_all = v_all.astype(jnp.bfloat16)

    # Per-head online softmax; K/V tile is loaded once and reused by all G
    # heads of the group (static slices of the loaded block).
    for g in range(G):
        lo = g * Dh
        q = q_all[:, lo:lo + Dh]      # (tq, Dh)
        k = k_all[:, lo:lo + Dh]      # (tk, Dh)
        v = v_all[:, lo:lo + Dh]      # (tk, Dh)

        # scores = q @ k^T  (1/sqrt(Dh) already folded into the Q projection)
        s = jax.lax.dot_general(q, k, (((1,), (1,)), ((), ())),
                                preferred_element_type=jnp.float32)

        m_prev = m_sc[g]                                   # (tq, 1)
        m_new = jnp.maximum(m_prev, jnp.max(s, axis=-1, keepdims=True))
        alpha = jnp.exp(m_prev - m_new)
        p = jnp.exp(s - m_new)
        l_sc[g] = alpha * l_sc[g] + jnp.sum(p, axis=-1, keepdims=True)
        acc_sc[g] = alpha * acc_sc[g] + jnp.dot(
            p.astype(v.dtype), v, preferred_element_type=jnp.float32)
        m_sc[g] = m_new

    @pl.when(kv == pl.num_programs(2) - 1)
    def _():
        outs = []
        for g in range(G):
            inv_l = pl.reciprocal(l_sc[g], approx=True)    # EUP slot
            outs.append((acc_sc[g] * inv_l).astype(o_ref.dtype))
        o_ref[0] = outs[0] if G == 1 else jnp.concatenate(outs, axis=-1)


def _flash_attention(q, k, v, B, H, Dh, *, vmem_limit, mxu_bf16):
    Lq, E = q.shape[1], q.shape[2]
    Lk = k.shape[1]

    # Heads per grid step: smallest group whose block last dim is a multiple
    # of 128 lanes; otherwise all heads (block == E, always a legal block).
    G = H
    for cand in range(1, H + 1):
        if H % cand == 0 and (cand * Dh) % 128 == 0:
            G = cand
            break
    HG = H // G           # number of head groups along the E axis
    GD = G * Dh           # lanes per block

    tq = _pick_tile(Lq, (512, 256, 128, 64, 32, 16, 8))
    tk = _pick_tile(Lk, (512, 256, 128, 64, 32, 16, 8))
    n_kv = Lk // tk
    # TODO(synk): awkward (non multiple-of-8) sequence lengths fall back to a
    # single full-length tile; padding + in-kernel tail masking would keep the
    # MXU full for those shapes.

    kv_kwargs = {}
    if n_kv >= 3:
        kv_kwargs["pipeline_mode"] = pl.Buffered(3)   # hide K/V DMA on long kv loops

    kernel = functools.partial(_flash_attn_kernel, G=G, Dh=Dh,
                               mxu_bf16=mxu_bf16)
    return pl.pallas_call(
        kernel,
        out_shape=jax.ShapeDtypeStruct((B, Lq, E), q.dtype),
        grid_spec=pltpu.PrefetchScalarGridSpec(
            num_scalar_prefetch=0,
            grid=(B * HG, Lq // tq, n_kv),
            in_specs=[
                pl.BlockSpec((1, tq, GD),
                             lambda n, qi, ki: (n // HG, qi, n % HG)),
                pl.BlockSpec((1, tk, GD),
                             lambda n, qi, ki: (n // HG, ki, n % HG),
                             **kv_kwargs),
                pl.BlockSpec((1, tk, GD),
                             lambda n, qi, ki: (n // HG, ki, n % HG),
                             **kv_kwargs),
            ],
            out_specs=pl.BlockSpec((1, tq, GD),
                                   lambda n, qi, ki: (n // HG, qi, n % HG)),
            scratch_shapes=[
                pltpu.VMEM((G, tq, 1), jnp.float32),    # running max / head
                pltpu.VMEM((G, tq, 1), jnp.float32),    # running denom / head
                pltpu.VMEM((G, tq, Dh), jnp.float32),   # f32 out accumulator
            ],
        ),
        compiler_params=pltpu.CompilerParams(
            dimension_semantics=("parallel", "parallel", "arbitrary"),
            vmem_limit_bytes=vmem_limit,
        ),
    )(q, k, v)


# ---------------------------------------------------------------------------
# Full module: CrossAttention.forward(q, k, v)
# ---------------------------------------------------------------------------
def cross_attention(q, k, v, params, num_heads, *, mxu_bf16=False):
    """Pallas equivalent of nn.MultiheadAttention(batch_first=True)(q, k, v)[0].

    mxu_bf16: cast f32 MXU operands to bf16 (f32 accumulation kept) — a pure
    perf/accuracy knob; default False for exact parity with the reference.
    """
    B, Lq, E = q.shape
    Lk = k.shape[1]
    assert E % num_heads == 0
    H = num_heads
    Dh = E // H
    dtype = q.dtype
    scale = 1.0 / math.sqrt(Dh)
    vmem_limit = _vmem_limit_bytes()

    # Weights stay in their native dtype (bf16 stays bf16).
    w_in_t = params["in_proj_weight"].T        # (E, 3E)
    b_in = params["in_proj_bias"]              # (3E,)
    w_out_t = params["out_proj_weight"].T      # (E, E)
    b_out = params["out_proj_bias"][None, :]   # (1, E)

    # Fold the 1/sqrt(Dh) softmax scale into the Q projection (exact; removes
    # a full (tq, tk) f32 multiply per kv step inside the flash kernel).
    w_q = w_in_t[:, 0:E] * scale
    b_q = (b_in[0:E] * scale)[None, :]
    w_k = w_in_t[:, E:2 * E]
    b_k = b_in[None, E:2 * E]
    w_v = w_in_t[:, 2 * E:3 * E]
    b_v = b_in[None, 2 * E:3 * E]

    proj = functools.partial(_projection, vmem_limit=vmem_limit,
                             mxu_bf16=mxu_bf16)
    qp = proj(q.reshape(B * Lq, E), w_q, b_q, dtype).reshape(B, Lq, E)
    kp = proj(k.reshape(B * Lk, E), w_k, b_k, dtype).reshape(B, Lk, E)
    vp = proj(v.reshape(B * Lk, E), w_v, b_v, dtype).reshape(B, Lk, E)

    # Flash attention straight on the (B, L, E) layout; heads are selected by
    # the BlockSpec index_map — no split/merge transposes through HBM.
    attn = _flash_attention(qp, kp, vp, B, H, Dh,
                            vmem_limit=vmem_limit, mxu_bf16=mxu_bf16)

    out = proj(attn.reshape(B * Lq, E), w_out_t, b_out, dtype)
    return out.reshape(B, Lq, E)


# ---------------------------------------------------------------------------
# Pure-JAX reference (mirrors torch.nn.MultiheadAttention forward, no mask)
# ---------------------------------------------------------------------------
def cross_attention_ref(q, k, v, params, num_heads):
    B, Lq, E = q.shape
    Lk = k.shape[1]
    Dh = E // num_heads
    w_in = params["in_proj_weight"]          # (3E, E)
    b_in = params["in_proj_bias"]            # (3E,)
    qp = q @ w_in[0:E].T + b_in[0:E]
    kp = k @ w_in[E:2 * E].T + b_in[E:2 * E]
    vp = v @ w_in[2 * E:3 * E].T + b_in[2 * E:3 * E]

    def split(x, L):
        return x.reshape(B, L, num_heads, Dh).transpose(0, 2, 1, 3)

    qh, kh, vh = split(qp, Lq), split(kp, Lk), split(vp, Lk)
    s = jnp.einsum("bhqd,bhkd->bhqk", qh, kh) / math.sqrt(Dh)
    p = jax.nn.softmax(s, axis=-1)
    a = jnp.einsum("bhqk,bhkd->bhqd", p, vh)
    a = a.transpose(0, 2, 1, 3).reshape(B, Lq, E)
    return a @ params["out_proj_weight"].T + params["out_proj_bias"]


def init_params(key, embed_dim):
    """Deterministic synthetic weights with nn.MultiheadAttention shapes."""
    k1, k2 = jax.random.split(key)
    bound = 1.0 / math.sqrt(embed_dim)
    return {
        "in_proj_weight": jax.random.uniform(
            k1, (3 * embed_dim, embed_dim), jnp.float32, -bound, bound),
        "in_proj_bias": jnp.zeros((3 * embed_dim,), jnp.float32),
        "out_proj_weight": jax.random.uniform(
            k2, (embed_dim, embed_dim), jnp.float32, -bound, bound),
        "out_proj_bias": jnp.zeros((embed_dim,), jnp.float32),
    }


if __name__ == "__main__":
    # TODO(synk): attn_mask / key_padding_mask / dropout paths of
    # nn.MultiheadAttention are not implemented (module is used mask-free).
    B, Lq, Lk, E, H = 2, 8, 16, 32, 4

    root = jax.random.PRNGKey(0)
    kq, kk_, kv_, kp_ = jax.random.split(root, 4)
    q = jax.random.normal(kq, (B, Lq, E), jnp.float32)
    k = jax.random.normal(kk_, (B, Lk, E), jnp.float32)
    v = jax.random.normal(kv_, (B, Lk, E), jnp.float32)
    params = init_params(kp_, E)

    out = cross_attention(q, k, v, params, num_heads=H)
    out = jax.block_until_ready(out)

    ref = cross_attention_ref(q, k, v, params, num_heads=H)
    assert out.shape == (B, Lq, E)
    err = float(jnp.max(jnp.abs(out - ref)))
    # Tolerance slightly relaxed vs the pure-f32 reference because the softmax
    # denominator uses the EUP approximate reciprocal.
    assert err < 2e-3, f"mismatch vs pure-JAX reference: {err}"

    print("KERNEL_OK")
</pallas_src>

<mosaic_0001>
module attributes {stable_mosaic.version = 11 : i64} {
  func.func @_matmul_bias_kernel(%arg0: i32, %arg1: i32, %arg2: i32, %arg3: memref<16x32xf32, #tpu.memory_space<vmem>>, %arg4: memref<32x32xf32, #tpu.memory_space<vmem>>, %arg5: memref<1x32xf32, #tpu.memory_space<vmem>>, %arg6: memref<16x32xf32, #tpu.memory_space<vmem>>, %arg7: memref<16x32xf32, #tpu.memory_space<vmem>>) attributes {dimension_semantics = [#tpu.dimension_semantics<parallel>, #tpu.dimension_semantics<parallel>, #tpu.dimension_semantics<arbitrary>], iteration_bounds = array<i64: 1, 1, 1>, scalar_prefetch = 0 : i64, scratch_operands = 1 : i64, tpu.core_type = #tpu.core_type<tc>, window_params = [{transform_indices = @transform_0, window_bounds = array<i64: 16, 32>}, {transform_indices = @transform_1, window_bounds = array<i64: 32, 32>}, {transform_indices = @transform_2, window_bounds = array<i64: 1, 32>}, {transform_indices = @transform_3, window_bounds = array<i64: 16, 32>}]} {
    %c0_i32 = arith.constant 0 : i32
    %0 = arith.cmpi eq, %arg2, %c0_i32 : i32
    %1 = arith.extui %0 : i1 to i32
    %c0_i32_0 = arith.constant 0 : i32
    %2 = arith.cmpi ne, %1, %c0_i32_0 : i32
    scf.if %2 {
      %cst_10 = arith.constant 0.000000e+00 : f32
      %12 = vector.broadcast %cst_10 : f32 to vector<16x32xf32>
      %c0_11 = arith.constant 0 : index
      %c0_12 = arith.constant 0 : index
      %13 = vector.load %arg7[%c0_11, %c0_12] : memref<16x32xf32, #tpu.memory_space<vmem>>, vector<16x32xf32>
      tpu.vector_store %arg7[%c0_11, %c0_12], %12 {strides = array<i32>} : memref<16x32xf32, #tpu.memory_space<vmem>>, vector<16x32xf32>,
    } else {
    }
    %c0 = arith.constant 0 : index
    %c0_1 = arith.constant 0 : index
    %3 = vector.load %arg3[%c0, %c0_1] : memref<16x32xf32, #tpu.memory_space<vmem>>, vector<16x32xf32>
    %c0_2 = arith.constant 0 : index
    %c0_3 = arith.constant 0 : index
    %4 = vector.load %arg4[%c0_2, %c0_3] : memref<32x32xf32, #tpu.memory_space<vmem>>, vector<32x32xf32>
    %c0_4 = arith.constant 0 : index
    %c0_5 = arith.constant 0 : index
    %5 = vector.load %arg7[%c0_4, %c0_5] : memref<16x32xf32, #tpu.memory_space<vmem>>, vector<16x32xf32>
    %cst = arith.constant dense<0.000000e+00> : vector<16x32xf32>
    %6 = tpu.matmul %3, %4, %cst {dimension_numbers = #tpu.dot_dimension_numbers<[1], [0], [0], [1], [0, 0, 1, 1], [], []>} : vector<16x32xf32>, vector<32x32xf32>, vector<16x32xf32> -> vector<16x32xf32>
    %7 = arith.addf %5, %6 : vector<16x32xf32>
    %c0_6 = arith.constant 0 : index
    %c0_7 = arith.constant 0 : index
    %8 = vector.load %arg7[%c0_6, %c0_7] : memref<16x32xf32, #tpu.memory_space<vmem>>, vector<16x32xf32>
    tpu.vector_store %arg7[%c0_6, %c0_7], %7 {strides = array<i32>} : memref<16x32xf32, #tpu.memory_space<vmem>>, vector<16x32xf32>,
    %c0_i32_8 = arith.constant 0 : i32
    %9 = arith.cmpi eq, %arg2, %c0_i32_8 : i32
    %10 = arith.extui %9 : i1 to i32
    %c0_i32_9 = arith.constant 0 : i32
    %11 = arith.cmpi ne, %10, %c0_i32_9 : i32
    scf.if %11 {
      %c0_10 = arith.constant 0 : index
      %c0_11 = arith.constant 0 : index
      %12 = vector.load %arg7[%c0_10, %c0_11] : memref<16x32xf32, #tpu.memory_space<vmem>>, vector<16x32xf32>
      %c0_12 = arith.constant 0 : index
      %c0_13 = arith.constant 0 : index
      %13 = vector.load %arg5[%c0_12, %c0_13] : memref<1x32xf32, #tpu.memory_space<vmem>>, vector<1x32xf32>
      %14 = vector.broadcast %13 : vector<1x32xf32> to vector<16x32xf32>
      %15 = arith.addf %12, %14 : vector<16x32xf32>
      %c0_14 = arith.constant 0 : index
      %c0_15 = arith.constant 0 : index
      %16 = vector.load %arg6[%c0_14, %c0_15] : memref<16x32xf32, #tpu.memory_space<vmem>>, vector<16x32xf32>
      tpu.vector_store %arg6[%c0_14, %c0_15], %15 {strides = array<i32>} : memref<16x32xf32, #tpu.memory_space<vmem>>, vector<16x32xf32>,
    } else {
    }
    return
  }
  func.func @transform_0(%arg0: i32, %arg1: i32, %arg2: i32) -> (i32, i32) {
    %c0_i32 = arith.constant 0 : i32
    return %arg0, %arg2 : i32, i32
  }
  func.func @transform_1(%arg0: i32, %arg1: i32, %arg2: i32) -> (i32, i32) {
    %c0_i32 = arith.constant 0 : i32
    return %arg2, %arg1 : i32, i32
  }
  func.func @transform_2(%arg0: i32, %arg1: i32, %arg2: i32) -> (i32, i32) {
    %c0_i32 = arith.constant 0 : i32
    %c0_i32_0 = arith.constant 0 : i32
    return %c0_i32, %arg1 : i32, i32
  }
  func.func @transform_3(%arg0: i32, %arg1: i32, %arg2: i32) -> (i32, i32) {
    %c0_i32 = arith.constant 0 : i32
    return %arg0, %arg1 : i32, i32
  }
}

</mosaic_0001>

<llo_original>
// kernel: tpu_custom_call.1
$region0: #{tpu_custom_call.1}
  #allocation0 [shape = 'u32[]', space=smem, size = 0x4, offset = 0x4, fixed_abs, tag = 'smem constant byte address 0x4 - core index']
  #allocation1 [shape = 'u32[144,128]{1,0:T(1,128)}', space=vmem, size = 0x12000, scoped, tag = 'internal scratch']
  #allocation2 [shape = 'f32[16,32]{1,0:T(8,128)}', space=vmem, size = 0x2000, scoped, tag = 'scratch operand']
  %s0 = inlined_call_operand.hbm [shape: f32[16,32], index: 0, kind: input, shape index: {}]
  %s1 = inlined_call_operand.hbm [shape: f32[32,32], index: 1, kind: input, shape index: {}]
  %s2 = inlined_call_operand.vmem [shape: f32[1,32], index: 2, kind: input, shape index: {}]
  %s3 = inlined_call_operand.hbm [shape: f32[16,32], index: 3, kind: output, shape index: {}]
  %s4 = sld [smem:[#allocation0]]
  $region38: #{tpu_custom_call.1} parent=0
    _
  %s6 = ssub.s32 1, %s4
  %s7 = scalar_select 0, %s6, %s4
  $region1: #{tpu_custom_call.1} parent=0
    #allocation3 [shape = 'u8[8192]{0}', space=vmem, size = 0x2000, scoped, tag = 'input window, operand 0, single buffered']
    #allocation4 [shape = 's32[1]{0}', space=sflag, size = 0x4, scoped, tag = 'scoped memory for tpu_custom_call.1']
    #allocation5 [shape = 's32[1]{0}', space=sflag, size = 0x4, scoped, tag = 'scoped memory for tpu_custom_call.1']
    #allocation6 [shape = 'u8[16384]{0}', space=vmem, size = 0x4000, scoped, tag = 'input window, operand 1, single buffered']
    #allocation7 [shape = 's32[1]{0}', space=sflag, size = 0x4, scoped, tag = 'scoped memory for tpu_custom_call.1']
    #allocation8 [shape = 'u8[8192]{0}', space=vmem, size = 0x2000, scoped, tag = 'output window, operand 0, single buffered']
    %8 = vsyncpa [#allocation4], 0
    %9 = vsyncpa [#allocation7], 0
    %10 = vsyncpa [#allocation5], 0
    // Predicated region
    $region2: #{tpu_custom_call.1} parent=1 // pred_check
      _
    $region3: #{tpu_custom_call.1} parent=1 // pred_check_branch
      %12 = sbr.rel (0) target = $region5
    $region4: #{tpu_custom_call.1} parent=1 // pred_region
      %s14 = ssub.s32 256, 256
      %15 = vsyncadd [#allocation4], %s14
      %s16 = sshll.u32 [#allocation3], 4
      %s17 = int_to_ptr.vmem [resolvable:$true] %s16
      %22 = dma.hbm_to_vmem [thread:$0]  %s0, 256, %s17, [#allocation4], 128, 128, 8
    $region5: #{tpu_custom_call.1} parent=1 // pred_fallthru
      _
    // Predicated region
    $region6: #{tpu_custom_call.1} parent=1 // pred_check
      _
    $region7: #{tpu_custom_call.1} parent=1 // pred_check_branch
      %24 = sbr.rel (0) target = $region9
    $region8: #{tpu_custom_call.1} parent=1 // pred_region
      %s26 = ssub.s32 512, 512
      %27 = vsyncadd [#allocation7], %s26
      %s28 = sshll.u32 [#allocation6], 4
      %s29 = int_to_ptr.vmem [resolvable:$true] %s28
      %34 = dma.hbm_to_vmem [thread:$0]  %s1, 512, %s29, [#allocation7], 128, 128, 8
    $region9: #{tpu_custom_call.1} parent=1 // pred_fallthru
      _
    // Predicated region
    $region10: #{tpu_custom_call.1} parent=1 // pred_check
      _
    $region11: #{tpu_custom_call.1} parent=1 // pred_check_branch
      %36 = sbr.rel (0) target = $region13
    $region12: #{tpu_custom_call.1} parent=1 // pred_region
      _
    $region13: #{tpu_custom_call.1} parent=1 // pred_fallthru
      _
    // Predicated region
    $region14: #{tpu_custom_call.1} parent=1 // pred_check
      _
    $region15: #{tpu_custom_call.1} parent=1 // pred_check_branch
      %38 = sbr.rel (0) target = $region17
    $region16: #{tpu_custom_call.1} parent=1 // pred_region
      %39 = dma.done [#allocation4], 256
    $region17: #{tpu_custom_call.1} parent=1 // pred_fallthru
      _
    // Predicated region
    $region18: #{tpu_custom_call.1} parent=1 // pred_check
      _
    $region19: #{tpu_custom_call.1} parent=1 // pred_check_branch
      %41 = sbr.rel (0) target = $region21
    $region20: #{tpu_custom_call.1} parent=1 // pred_region
      %42 = dma.done [#allocation7], 512
    $region21: #{tpu_custom_call.1} parent=1 // pred_fallthru
      _
    %p43 = scmp.eq.s32.totalorder 0, 0
    // Predicated region
    $region22: #{tpu_custom_call.1} parent=1 // pred_check
      %p44 = pneg %p43
    $region23: #{tpu_custom_call.1} parent=1 // pred_check_branch
      %46 = sbr.rel (%p44) target = $region25
    $region24: #{tpu_custom_call.1} parent=1 // pred_region
      %vm47 = vcmask 261120
      %48 = vst.msk [vmem:[#allocation2] sm:$0xff] %vm47, 0.0
      %49 = vst.msk [vmem:[#allocation2 + $0x8] sm:$0xff] %vm47, 0.0
    $region25: #{tpu_custom_call.1} parent=1 // pred_fallthru
      _
    %v50 = vld [vmem:[#allocation3] sm:$0xff]
    %v51 = vld [vmem:[#allocation3 + $0x8] sm:$0xff]
    %v52 = vld [vmem:[#allocation6] sm:$0xff]
    %v53 = vld [vmem:[#allocation6 + $0x8] sm:$0xff]
    %v54 = vld [vmem:[#allocation6 + $0x10] sm:$0xff]
    %v55 = vld [vmem:[#allocation6 + $0x18] sm:$0xff]
    %v56 = vld [vmem:[#allocation2] sm:$0xff]
    %v57 = vld [vmem:[#allocation2 + $0x8] sm:$0xff]
    %vm58 = vcmask 261120
    %v60 = vsel %vm58, %v50, 0
    %v63 = vsel %vm58, %v51, 0
    %65 = vmatprep.subr.mxu0 0.0
    %66 = vmatpush1.msra.mxu0 %v52
    %67 = vmatprep.subr.mxu0 0.0
    %68 = vmatpush1.msra.mxu0 %v53
    %69 = vmatprep.subr.mxu0 0.0
    %70 = vmatpush1.msra.mxu0 %v54
    %71 = vmatprep.subr.mxu0 0.0
    %72 = vmatpush1.msra.mxu0 %v55
    %73 = vmatprep.subr.mxu0 0.0
    %74 = vmatpush1.msra.mxu0 0.0
    %75 = vmatprep.subr.mxu0 0.0
    %76 = vmatpush1.msra.mxu0 0.0
    %77 = vmatprep.subr.mxu0 0.0
    %78 = vmatpush1.msra.mxu0 0.0
    %79 = vmatprep.subr.mxu0 0.0
    %80 = vmatpush1.msra.mxu0 0.0
    %81 = vmatprep.subr.mxu0 0.0
    %82 = vmatpush1.msra.mxu0 0.0
    %83 = vmatprep.subr.mxu0 0.0
    %84 = vmatpush1.msra.mxu0 0.0
    %85 = vmatprep.subr.mxu0 0.0
    %86 = vmatpush1.msra.mxu0 0.0
    %87 = vmatprep.subr.mxu0 0.0
    %88 = vmatpush1.msra.mxu0 0.0
    %89 = vmatprep.subr.mxu0 0.0
    %90 = vmatpush1.msra.mxu0 0.0
    %91 = vmatprep.subr.mxu0 0.0
    %92 = vmatpush1.msra.mxu0 0.0
    %93 = vmatprep.subr.mxu0 0.0
    %94 = vmatpush1.msra.mxu0 0.0
    %95 = vmatprep.subr.mxu0 0.0
    %96 = vmatpush1.msra.mxu0 0.0
    %97 = vmatprep.subr.mxu0 0.0
    %98 = vmatpush1.msra.mxu0 0.0
    %99 = vmatprep.subr.mxu0 0.0
    %100 = vmatpush1.msra.mxu0 0.0
    %101 = vmatprep.subr.mxu0 0.0
    %102 = vmatpush1.msra.mxu0 0.0
    %103 = vmatprep.subr.mxu0 0.0
    %104 = vmatpush1.msra.mxu0 0.0
    %105 = vmatprep.subr.mxu0 0.0
    %106 = vmatpush1.msra.mxu0 0.0
    %107 = vmatprep.subr.mxu0 0.0
    %108 = vmatpush1.msra.mxu0 0.0
    %109 = vmatprep.subr.mxu0 0.0
    %110 = vmatpush1.msra.mxu0 0.0
    %111 = vmatprep.subr.mxu0 0.0
    %112 = vmatpush1.msra.mxu0 0.0
    %113 = vmatprep.subr.mxu0 0.0
    %114 = vmatpush1.msra.mxu0 0.0
    %115 = vmatprep.subr.mxu0 0.0
    %116 = vmatpush1.msra.mxu0 0.0
    %117 = vmatprep.subr.mxu0 0.0
    %118 = vmatpush1.msra.mxu0 0.0
    %119 = vmatprep.subr.mxu0 0.0
    %120 = vmatpush1.msra.mxu0 0.0
    %121 = vmatprep.subr.mxu0 0.0
    %122 = vmatpush1.msra.mxu0 0.0
    %123 = vmatprep.subr.mxu0 0.0
    %124 = vmatpush1.msra.mxu0 0.0
    %125 = vmatprep.subr.mxu0 0.0
    %126 = vmatpush1.msra.mxu0 0.0
    %127 = vmatprep.subr.mxu0 0.0
    %128 = vmatpush1.msra.mxu0 0.0
    %129 = vmatprep.mubr.f32.mxu0 0.0
    %130 = vmatmul.mubr.f32.gmra.mrb[0].mxu0 %v60
    %v131 = vpop.f32.mrb[0].mxu0
    %v132 = vadd.f32 0.0, %v131
    %v133 = vpop.f32.mrb[0].mxu0
    %134 = vmatprep.mubr.f32.mxu0 0.0
    %135 = vmatmul.mubr.f32.gmra.mrb[0].mxu0 %v63
    %v136 = vpop.f32.mrb[0].mxu0
    %v137 = vadd.f32 0.0, %v136
    %v138 = vpop.f32.mrb[0].mxu0
    %139 = vdwg.mxu0
    %v140 = vadd.f32 %v56, %v132
    %v141 = vadd.f32 %v57, %v137
    %142 = vst.msk [vmem:[#allocation2] sm:$0xff] %vm58, %v140
    %143 = vst.msk [vmem:[#allocation2 + $0x8] sm:$0xff] %vm58, %v141
    // Predicated region
    $region26: #{tpu_custom_call.1} parent=1 // pred_check
      %p144 = pneg %p43
    $region27: #{tpu_custom_call.1} parent=1 // pred_check_branch
      %146 = sbr.rel (%p144) target = $region29
    $region28: #{tpu_custom_call.1} parent=1 // pred_region
      %v147 = vld [vmem:[#allocation2] sm:$0xff]
      %v148 = vld [vmem:[#allocation2 + $0x8] sm:$0xff]
      %v149 = vld [vmem:[%s2] sm:$0x1]
      %v151 = vlaneseq
      %v152 = vshrl.u32 %v151, 7
      %v153 = vsub.s32 0, %v152
      %v154 = vrot.slane %v149, %v153
      %v156 = vadd.f32 %v147, %v154
      %v157 = vadd.f32 %v148, %v154
      %158 = vst.msk [vmem:[#allocation8] sm:$0xff] %vm58, %v156
      %159 = vst.msk [vmem:[#allocation8 + $0x8] sm:$0xff] %vm58, %v157
    $region29: #{tpu_custom_call.1} parent=1 // pred_fallthru
      _
    // Predicated region
    $region30: #{tpu_custom_call.1} parent=1 // pred_check
      _
    $region31: #{tpu_custom_call.1} parent=1 // pred_check_branch
      %161 = sbr.rel (0) target = $region33
    $region32: #{tpu_custom_call.1} parent=1 // pred_region
      %s163 = ssub.s32 256, 256
      %164 = vsyncadd [#allocation5], %s163
      %s165 = sshll.u32 [#allocation8], 4
      %s166 = int_to_ptr.vmem [resolvable:$true] %s165
      %171 = dma.vmem_to_hbm [thread:$0]  %s166, 256, %s3, [#allocation5], 128, 128, 8
    $region33: #{tpu_custom_call.1} parent=1 // pred_fallthru
      _
    // Predicated region
    $region34: #{tpu_custom_call.1} parent=1 // pred_check
      _
    $region35: #{tpu_custom_call.1} parent=1 // pred_check_branch
      %173 = sbr.rel (0) target = $region37
    $region36: #{tpu_custom_call.1} parent=1 // pred_region
      %174 = dma.done [#allocation5], 256
    $region37: #{tpu_custom_call.1} parent=1 // pred_fallthru
      _
    %175 = vsyncpa [#allocation4], 1
    %176 = vsyncpa [#allocation7], 1
    %177 = vsyncpa [#allocation5], 1

</llo_original>
